<compile_context>
chip_gen: v5e
topology: v5e:2x2
jax: 0.10.0
libtpu: 0.0.40
codegen_flags: <defaults>
</compile_context>

<pallas_src>
import math

import jax
import jax.numpy as jnp
from jax.experimental import pallas as pl
from jax.experimental.pallas import tpu as pltpu

H_PAD = 128      # hidden lanes (gnn_hidden padded up to a full lane width)
GRAPH_PAD = 8    # num_graphs padded up to a sublane multiple


def _round_up(a, b):
    return ((a + b - 1) // b) * b


# --------------------------------------------------------------------------- #
# Fused kernel: tiled GCNConv  out = relu(A_hat @ XW + b)  + per-tile max pool
# --------------------------------------------------------------------------- #
def gcn_conv_pool_kernel(adj_ref, xw_ref, b_ref, mask_ref, out_ref, pool_ref):
    """grid = (row_tiles, src_tiles); reduction over the source-node axis.

    adj_ref  : (T, T)          bf16  A_hat[target_tile, source_tile]
    xw_ref   : (T, 128)        bf16  precomputed X @ W for this source tile
    b_ref    : (1, 128)        f32   GCNConv bias (zero-padded lanes)
    mask_ref : (T, B_pad)      f32   one-hot graph membership (node-major)
    out_ref  : (T, 128)        f32   resident across k; accumulator then result
    pool_ref : (1, B_pad, 128) f32   per-row-tile partial per-graph max
    """
    k = pl.program_id(1)

    @pl.when(k == 0)
    def _():
        out_ref[...] = jnp.zeros_like(out_ref)

    # bf16 x bf16 MXU matmul, fp32 accumulation directly in the resident block.
    out_ref[...] += jnp.dot(adj_ref[...], xw_ref[...],
                            preferred_element_type=jnp.float32)

    @pl.when(k == pl.num_programs(1) - 1)
    def _():
        # fp32 VPU finalize (v5e has no bf16 VPU): bias + ReLU in place.
        h = jnp.maximum(out_ref[...] + b_ref[...], 0.0)
        out_ref[...] = h

        # Fused global_max_pool partials.  h >= 0 post-ReLU, so masking by
        # multiplication with a 0-valued floor is exact (padded rows / graphs
        # with no node in this tile contribute 0 <= true max).
        m = mask_ref[...]                                # (T, B_pad)
        rows = []
        for g in range(m.shape[1]):                      # B_pad: small, static
            col = m[:, g:g + 1]                          # (T, 1) lane slice
            rows.append(jnp.max(h * col, axis=0, keepdims=True))   # (1, 128)
        pool_ref[...] = jnp.concatenate(rows, axis=0)[None]        # (1,B_pad,128)


# --------------------------------------------------------------------------- #
# Glue (plain JAX): edge-list -> padded bf16 normalized adjacency, wrapper
# --------------------------------------------------------------------------- #
def build_gcn_adj_padded(edge_index, num_nodes, n_pad, dtype):
    """D^-1/2 (A + I) D^-1/2 with A_hat[target, source], scattered straight
    into a zero-padded `dtype` buffer (O(E) degree, single N^2 scatter)."""
    src = edge_index[0]
    dst = edge_index[1]
    # in-degree + self-loop (PyG gcn_norm with add_self_loops=True)
    deg = jnp.zeros((num_nodes,), jnp.float32).at[dst].add(1.0) + 1.0
    dinv = 1.0 / jnp.sqrt(deg)
    ew = (dinv[dst] * dinv[src]).astype(dtype)
    adj = jnp.zeros((n_pad, n_pad), dtype)
    adj = adj.at[dst, src].set(ew)                       # edge: source -> target
    diag = jnp.arange(num_nodes)
    adj = adj.at[diag, diag].set((dinv * dinv).astype(dtype))   # self loops
    return adj


def encoder_forward(x, api_feat, root_feat, root_id, fw_edge_idx, bw_edge_idx,
                    batch, num_graphs, params, *, tile=512,
                    adj_dtype=jnp.bfloat16):
    """Mirrors Encoder.forward for conf.gnn_type == 'gcn'.

    api_feat / root_feat / root_id / bw_edge_idx are accepted for signature
    fidelity but are unused in the gcn branch (same as the PyTorch code).
    """
    del api_feat, root_feat, root_id, bw_edge_idx    # unused in gcn branch

    n_nodes = x.shape[0]
    hidden = params["w"].shape[1]
    assert hidden <= H_PAD

    # Square tiles; clamp to the padded node count for tiny graphs.  For v7x
    # megacore keep n_pad // tile >= 2 on large graphs so the "parallel" row
    # axis shards across both TensorCores.
    tile = max(128, min(tile, _round_up(n_nodes, 128)))
    n_pad = _round_up(n_nodes, tile)
    b_pad = _round_up(num_graphs, GRAPH_PAD)
    n_row = n_pad // tile
    n_k = n_pad // tile

    # Padded bf16 normalized adjacency, built sparsely from the edge list.
    adj_p = build_gcn_adj_padded(fw_edge_idx, n_nodes, n_pad, adj_dtype)

    # XW precomputed once (K = x_dim is tiny), cast to bf16 for the MXU.
    xw = (x @ params["w"]).astype(adj_dtype)                       # (N, hidden)
    xw_p = jnp.zeros((n_pad, H_PAD), adj_dtype).at[:n_nodes, :hidden].set(xw)

    b_p = jnp.zeros((1, H_PAD), jnp.float32).at[0, :hidden].set(params["b"])

    # Node-major (N, B_pad) one-hot membership: per-graph column = lane slice.
    mask_p = jnp.zeros((n_pad, b_pad), jnp.float32).at[:n_nodes, :num_graphs].set(
        (batch[:, None] == jnp.arange(num_graphs)[None, :]).astype(jnp.float32))

    x_out_pad, pool_part = pl.pallas_call(
        gcn_conv_pool_kernel,
        out_shape=(
            jax.ShapeDtypeStruct((n_pad, H_PAD), jnp.float32),
            jax.ShapeDtypeStruct((n_row, b_pad, H_PAD), jnp.float32),
        ),
        grid_spec=pltpu.PrefetchScalarGridSpec(
            num_scalar_prefetch=0,
            grid=(n_row, n_k),
            in_specs=[
                pl.BlockSpec((tile, tile), lambda i, k: (i, k)),
                pl.BlockSpec((tile, H_PAD), lambda i, k: (k, 0)),
                pl.BlockSpec((1, H_PAD), lambda i, k: (0, 0)),
                pl.BlockSpec((tile, b_pad), lambda i, k: (i, 0)),
            ],
            out_specs=[
                pl.BlockSpec((tile, H_PAD), lambda i, k: (i, 0)),
                pl.BlockSpec((1, b_pad, H_PAD), lambda i, k: (i, 0, 0)),
            ],
        ),
        compiler_params=pltpu.CompilerParams(
            dimension_semantics=("parallel", "arbitrary")),
    )(adj_p, xw_p, b_p, mask_p)

    x_out = x_out_pad[:n_nodes, :hidden]
    graph_embed = jnp.max(pool_part, axis=0)[:num_graphs, :hidden]
    return x_out, graph_embed


def _reference(x, fw_edge_idx, batch, num_graphs, params,
               adj_dtype=jnp.bfloat16):
    """Pure-JAX reference (same bf16 operand rounding as the kernel path)."""
    n = x.shape[0]
    adj = build_gcn_adj_padded(fw_edge_idx, n, n, adj_dtype).astype(jnp.float32)
    xw = (x @ params["w"]).astype(adj_dtype).astype(jnp.float32)
    h = jnp.maximum(adj @ xw + params["b"][None, :], 0.0)
    mask = batch[None, :] == jnp.arange(num_graphs)[:, None]
    masked = jnp.where(mask[:, :, None], h[None, :, :], -jnp.inf)
    return h, jnp.max(masked, axis=1)


if __name__ == "__main__":
    # conf: x_dim=8, gnn_hidden=32, gnn_layers=2, gnn_type='gcn'
    N_NODES, X_DIM, HIDDEN, N_GRAPHS = 16, 8, 32, 2
    NODES_PER_GRAPH = N_NODES // N_GRAPHS

    key = jax.random.PRNGKey(0)
    k_x, k_api, k_root, k_w, k_b = jax.random.split(key, 5)

    x = jax.random.normal(k_x, (N_NODES, X_DIM), dtype=jnp.float32)
    api_feat = jax.random.normal(k_api, (N_NODES, X_DIM), dtype=jnp.float32)    # unused (gcn branch)
    root_feat = jax.random.normal(k_root, (N_GRAPHS, X_DIM), dtype=jnp.float32)  # unused (gcn branch)
    root_id = jnp.array([0, NODES_PER_GRAPH], dtype=jnp.int32)                   # unused (gcn branch)

    # chain edges inside each graph; bw is the reversed edge set (unused in gcn branch)
    src = jnp.array(
        [g * NODES_PER_GRAPH + i for g in range(N_GRAPHS) for i in range(NODES_PER_GRAPH - 1)],
        dtype=jnp.int32)
    dst = src + 1
    fw_edge_idx = jnp.stack([src, dst])
    bw_edge_idx = jnp.stack([dst, src])
    batch = jnp.array([g for g in range(N_GRAPHS) for _ in range(NODES_PER_GRAPH)],
                      dtype=jnp.int32)

    # Deterministic GCNConv parameters (glorot-scaled weight, small bias).
    # All gnn_layers deepcopies share these weights, matching the PyTorch module.
    scale = math.sqrt(2.0 / (X_DIM + HIDDEN))
    params = {
        "w": jax.random.normal(k_w, (X_DIM, HIDDEN), dtype=jnp.float32) * scale,
        "b": jax.random.normal(k_b, (HIDDEN,), dtype=jnp.float32) * 0.1,
    }

    x_out, graph_embed = encoder_forward(
        x, api_feat, root_feat, root_id, fw_edge_idx, bw_edge_idx, batch,
        N_GRAPHS, params)
    jax.block_until_ready((x_out, graph_embed))

    # silent correctness check vs pure-JAX reference
    ref_x, ref_g = _reference(x, fw_edge_idx, batch, N_GRAPHS, params)
    assert x_out.shape == (N_NODES, HIDDEN) and graph_embed.shape == (N_GRAPHS, HIDDEN)
    assert jnp.allclose(x_out, ref_x, atol=1e-3, rtol=1e-4)
    assert jnp.allclose(graph_embed, ref_g, atol=1e-3, rtol=1e-4)

    print("KERNEL_OK")
</pallas_src>

<mosaic_0001>
module attributes {stable_mosaic.version = 11 : i64} {
  func.func @gcn_conv_pool_kernel(%arg0: i32, %arg1: i32, %arg2: memref<128x128xbf16, #tpu.memory_space<vmem>>, %arg3: memref<128x128xbf16, #tpu.memory_space<vmem>>, %arg4: memref<1x128xf32, #tpu.memory_space<vmem>>, %arg5: memref<128x8xf32, #tpu.memory_space<vmem>>, %arg6: memref<128x128xf32, #tpu.memory_space<vmem>>, %arg7: memref<1x8x128xf32, #tpu.memory_space<vmem>>) attributes {dimension_semantics = [#tpu.dimension_semantics<parallel>, #tpu.dimension_semantics<arbitrary>], iteration_bounds = array<i64: 1, 1>, scalar_prefetch = 0 : i64, scratch_operands = 0 : i64, tpu.core_type = #tpu.core_type<tc>, window_params = [{transform_indices = @transform_0, window_bounds = array<i64: 128, 128>}, {transform_indices = @transform_1, window_bounds = array<i64: 128, 128>}, {pipeline_mode = #tpu.pipeline_mode<synchronous>, transform_indices = @transform_2, window_bounds = array<i64: 1, 128>}, {transform_indices = @transform_3, window_bounds = array<i64: 128, 8>}, {transform_indices = @transform_4, window_bounds = array<i64: 128, 128>}, {transform_indices = @transform_5, window_bounds = array<i64: 1, 8, 128>}]} {
    %c0_i32 = arith.constant 0 : i32
    %0 = arith.cmpi eq, %arg1, %c0_i32 : i32
    %1 = arith.extui %0 : i1 to i32
    %c0_i32_0 = arith.constant 0 : i32
    %2 = arith.cmpi ne, %1, %c0_i32_0 : i32
    scf.if %2 {
      %cst_10 = arith.constant 0.000000e+00 : f32
      %12 = vector.broadcast %cst_10 : f32 to vector<128x128xf32>
      %c0_11 = arith.constant 0 : index
      %c0_12 = arith.constant 0 : index
      %13 = vector.load %arg6[%c0_11, %c0_12] : memref<128x128xf32, #tpu.memory_space<vmem>>, vector<128x128xf32>
      tpu.vector_store %arg6[%c0_11, %c0_12], %12 {strides = array<i32>} : memref<128x128xf32, #tpu.memory_space<vmem>>, vector<128x128xf32>,
    } else {
    }
    %c0 = arith.constant 0 : index
    %c0_1 = arith.constant 0 : index
    %3 = vector.load %arg6[%c0, %c0_1] : memref<128x128xf32, #tpu.memory_space<vmem>>, vector<128x128xf32>
    %c0_2 = arith.constant 0 : index
    %c0_3 = arith.constant 0 : index
    %4 = vector.load %arg2[%c0_2, %c0_3] : memref<128x128xbf16, #tpu.memory_space<vmem>>, vector<128x128xbf16>
    %c0_4 = arith.constant 0 : index
    %c0_5 = arith.constant 0 : index
    %5 = vector.load %arg3[%c0_4, %c0_5] : memref<128x128xbf16, #tpu.memory_space<vmem>>, vector<128x128xbf16>
    %cst = arith.constant dense<0.000000e+00> : vector<128x128xf32>
    %6 = tpu.matmul %4, %5, %cst {dimension_numbers = #tpu.dot_dimension_numbers<[1], [0], [0], [1], [0, 0, 1, 1], [], []>} : vector<128x128xbf16>, vector<128x128xbf16>, vector<128x128xf32> -> vector<128x128xf32>
    %7 = arith.addf %3, %6 : vector<128x128xf32>
    %c0_6 = arith.constant 0 : index
    %c0_7 = arith.constant 0 : index
    %8 = vector.load %arg6[%c0_6, %c0_7] : memref<128x128xf32, #tpu.memory_space<vmem>>, vector<128x128xf32>
    tpu.vector_store %arg6[%c0_6, %c0_7], %7 {strides = array<i32>} : memref<128x128xf32, #tpu.memory_space<vmem>>, vector<128x128xf32>,
    %c0_i32_8 = arith.constant 0 : i32
    %9 = arith.cmpi eq, %arg1, %c0_i32_8 : i32
    %10 = arith.extui %9 : i1 to i32
    %c0_i32_9 = arith.constant 0 : i32
    %11 = arith.cmpi ne, %10, %c0_i32_9 : i32
    scf.if %11 {
      %c0_10 = arith.constant 0 : index
      %c0_11 = arith.constant 0 : index
      %12 = vector.load %arg6[%c0_10, %c0_11] : memref<128x128xf32, #tpu.memory_space<vmem>>, vector<128x128xf32>
      %c0_12 = arith.constant 0 : index
      %c0_13 = arith.constant 0 : index
      %13 = vector.load %arg4[%c0_12, %c0_13] : memref<1x128xf32, #tpu.memory_space<vmem>>, vector<1x128xf32>
      %14 = vector.broadcast %13 : vector<1x128xf32> to vector<128x128xf32>
      %15 = arith.addf %12, %14 : vector<128x128xf32>
      %cst_14 = arith.constant 0.000000e+00 : f32
      %16 = vector.broadcast %cst_14 : f32 to vector<128x128xf32>
      %17 = arith.maximumf %15, %16 : vector<128x128xf32>
      %c0_15 = arith.constant 0 : index
      %c0_16 = arith.constant 0 : index
      %18 = vector.load %arg6[%c0_15, %c0_16] : memref<128x128xf32, #tpu.memory_space<vmem>>, vector<128x128xf32>
      tpu.vector_store %arg6[%c0_15, %c0_16], %17 {strides = array<i32>} : memref<128x128xf32, #tpu.memory_space<vmem>>, vector<128x128xf32>,
      %c0_17 = arith.constant 0 : index
      %c0_18 = arith.constant 0 : index
      %19 = vector.load %arg5[%c0_17, %c0_18] : memref<128x8xf32, #tpu.memory_space<vmem>>, vector<128x8xf32>
      %20 = vector.extract_strided_slice %19 {offsets = [0, 0], sizes = [128, 1], strides = [1, 1]} : vector<128x8xf32> to vector<128x1xf32>
      %21 = vector.broadcast %20 : vector<128x1xf32> to vector<128x128xf32>
      %22 = arith.mulf %17, %21 : vector<128x128xf32>
      %cst_19 = arith.constant dense<0xFF800000> : vector<128xf32>
      %23 = vector.multi_reduction <maximumf>, %22, %cst_19 [0] : vector<128x128xf32> to vector<128xf32>
      %24 = vector.shape_cast %23 : vector<128xf32> to vector<1x128xf32>
      %25 = vector.extract_strided_slice %19 {offsets = [0, 1], sizes = [128, 1], strides = [1, 1]} : vector<128x8xf32> to vector<128x1xf32>
      %26 = vector.broadcast %25 : vector<128x1xf32> to vector<128x128xf32>
      %27 = arith.mulf %17, %26 : vector<128x128xf32>
      %cst_20 = arith.constant dense<0xFF800000> : vector<128xf32>
      %28 = vector.multi_reduction <maximumf>, %27, %cst_20 [0] : vector<128x128xf32> to vector<128xf32>
      %29 = vector.shape_cast %28 : vector<128xf32> to vector<1x128xf32>
      %30 = vector.extract_strided_slice %19 {offsets = [0, 2], sizes = [128, 1], strides = [1, 1]} : vector<128x8xf32> to vector<128x1xf32>
      %31 = vector.broadcast %30 : vector<128x1xf32> to vector<128x128xf32>
      %32 = arith.mulf %17, %31 : vector<128x128xf32>
      %cst_21 = arith.constant dense<0xFF800000> : vector<128xf32>
      %33 = vector.multi_reduction <maximumf>, %32, %cst_21 [0] : vector<128x128xf32> to vector<128xf32>
      %34 = vector.shape_cast %33 : vector<128xf32> to vector<1x128xf32>
      %35 = vector.extract_strided_slice %19 {offsets = [0, 3], sizes = [128, 1], strides = [1, 1]} : vector<128x8xf32> to vector<128x1xf32>
      %36 = vector.broadcast %35 : vector<128x1xf32> to vector<128x128xf32>
      %37 = arith.mulf %17, %36 : vector<128x128xf32>
      %cst_22 = arith.constant dense<0xFF800000> : vector<128xf32>
      %38 = vector.multi_reduction <maximumf>, %37, %cst_22 [0] : vector<128x128xf32> to vector<128xf32>
      %39 = vector.shape_cast %38 : vector<128xf32> to vector<1x128xf32>
      %40 = vector.extract_strided_slice %19 {offsets = [0, 4], sizes = [128, 1], strides = [1, 1]} : vector<128x8xf32> to vector<128x1xf32>
      %41 = vector.broadcast %40 : vector<128x1xf32> to vector<128x128xf32>
      %42 = arith.mulf %17, %41 : vector<128x128xf32>
      %cst_23 = arith.constant dense<0xFF800000> : vector<128xf32>
      %43 = vector.multi_reduction <maximumf>, %42, %cst_23 [0] : vector<128x128xf32> to vector<128xf32>
      %44 = vector.shape_cast %43 : vector<128xf32> to vector<1x128xf32>
      %45 = vector.extract_strided_slice %19 {offsets = [0, 5], sizes = [128, 1], strides = [1, 1]} : vector<128x8xf32> to vector<128x1xf32>
      %46 = vector.broadcast %45 : vector<128x1xf32> to vector<128x128xf32>
      %47 = arith.mulf %17, %46 : vector<128x128xf32>
      %cst_24 = arith.constant dense<0xFF800000> : vector<128xf32>
      %48 = vector.multi_reduction <maximumf>, %47, %cst_24 [0] : vector<128x128xf32> to vector<128xf32>
      %49 = vector.shape_cast %48 : vector<128xf32> to vector<1x128xf32>
      %50 = vector.extract_strided_slice %19 {offsets = [0, 6], sizes = [128, 1], strides = [1, 1]} : vector<128x8xf32> to vector<128x1xf32>
      %51 = vector.broadcast %50 : vector<128x1xf32> to vector<128x128xf32>
      %52 = arith.mulf %17, %51 : vector<128x128xf32>
      %cst_25 = arith.constant dense<0xFF800000> : vector<128xf32>
      %53 = vector.multi_reduction <maximumf>, %52, %cst_25 [0] : vector<128x128xf32> to vector<128xf32>
      %54 = vector.shape_cast %53 : vector<128xf32> to vector<1x128xf32>
      %55 = vector.extract_strided_slice %19 {offsets = [0, 7], sizes = [128, 1], strides = [1, 1]} : vector<128x8xf32> to vector<128x1xf32>
      %56 = vector.broadcast %55 : vector<128x1xf32> to vector<128x128xf32>
      %57 = arith.mulf %17, %56 : vector<128x128xf32>
      %cst_26 = arith.constant dense<0xFF800000> : vector<128xf32>
      %58 = vector.multi_reduction <maximumf>, %57, %cst_26 [0] : vector<128x128xf32> to vector<128xf32>
      %59 = vector.shape_cast %58 : vector<128xf32> to vector<1x128xf32>
      %60 = tpu.concatenate %24, %29, %34, %39, %44, %49, %54, %59 in 0 : vector<1x128xf32>, vector<1x128xf32>, vector<1x128xf32>, vector<1x128xf32>, vector<1x128xf32>, vector<1x128xf32>, vector<1x128xf32>, vector<1x128xf32> -> vector<8x128xf32>
      %61 = vector.shape_cast %60 : vector<8x128xf32> to vector<1x8x128xf32>
      %c0_27 = arith.constant 0 : index
      %c0_28 = arith.constant 0 : index
      %c0_29 = arith.constant 0 : index
      %62 = vector.load %arg7[%c0_27, %c0_28, %c0_29] : memref<1x8x128xf32, #tpu.memory_space<vmem>>, vector<1x8x128xf32>
      tpu.vector_store %arg7[%c0_27, %c0_28, %c0_29], %61 {strides = array<i32>} : memref<1x8x128xf32, #tpu.memory_space<vmem>>, vector<1x8x128xf32>,
    } else {
    }
    return
  }
  func.func @transform_0(%arg0: i32, %arg1: i32) -> (i32, i32) {
    %c0_i32 = arith.constant 0 : i32
    return %arg0, %arg1 : i32, i32
  }
  func.func @transform_1(%arg0: i32, %arg1: i32) -> (i32, i32) {
    %c0_i32 = arith.constant 0 : i32
    %c0_i32_0 = arith.constant 0 : i32
    return %arg1, %c0_i32 : i32, i32
  }
  func.func @transform_2(%arg0: i32, %arg1: i32) -> (i32, i32) {
    %c0_i32 = arith.constant 0 : i32
    %c0_i32_0 = arith.constant 0 : i32
    %c0_i32_1 = arith.constant 0 : i32
    return %c0_i32, %c0_i32_0 : i32, i32
  }
  func.func @transform_3(%arg0: i32, %arg1: i32) -> (i32, i32) {
    %c0_i32 = arith.constant 0 : i32
    %c0_i32_0 = arith.constant 0 : i32
    return %arg0, %c0_i32 : i32, i32
  }
  func.func @transform_4(%arg0: i32, %arg1: i32) -> (i32, i32) {
    %c0_i32 = arith.constant 0 : i32
    %c0_i32_0 = arith.constant 0 : i32
    return %arg0, %c0_i32 : i32, i32
  }
  func.func @transform_5(%arg0: i32, %arg1: i32) -> (i32, i32, i32) {
    %c0_i32 = arith.constant 0 : i32
    %c0_i32_0 = arith.constant 0 : i32
    %c0_i32_1 = arith.constant 0 : i32
    return %arg0, %c0_i32, %c0_i32_0 : i32, i32, i32
  }
}

</mosaic_0001>

<llo_original>
// kernel: tpu_custom_call.1
$region0: #{tpu_custom_call.1}
  #allocation0 [shape = 'u32[]', space=smem, size = 0x4, offset = 0x4, fixed_abs, tag = 'smem constant byte address 0x4 - core index']
  #allocation1 [shape = 'u32[72,128]{1,0:T(1,128)}', space=vmem, size = 0x9000, scoped, tag = 'internal scratch']
  %s0 = inlined_call_operand.vmem [shape: bf16[128,128], index: 0, kind: input, shape index: {}]
  %s1 = inlined_call_operand.vmem [shape: bf16[128,128], index: 1, kind: input, shape index: {}]
  %s2 = inlined_call_operand.vmem [shape: f32[1,128], index: 2, kind: input, shape index: {}]
  %s3 = inlined_call_operand.vmem [shape: f32[128,8], index: 3, kind: input, shape index: {}]
  %s4 = inlined_call_operand.hbm [shape: f32[128,128], index: 4, kind: output, shape index: {0}]
  %s5 = inlined_call_operand.hbm [shape: f32[1,8,128], index: 5, kind: output, shape index: {1}]
  %6 = xla_tuple %s4, %s5
  %s7 = sld [smem:[#allocation0]]
  $region42: #{tpu_custom_call.1} parent=0
    _
  %s9 = ssub.s32 1, %s7
  %s10 = scalar_select 0, %s9, %s7
  $region1: #{tpu_custom_call.1} parent=0
    #allocation2 [shape = 'u8[65536]{0}', space=vmem, size = 0x10000, scoped, tag = 'output window, operand 0, single buffered']
    #allocation3 [shape = 's32[1]{0}', space=sflag, size = 0x4, scoped, tag = 'scoped memory for tpu_custom_call.1']
    #allocation4 [shape = 'u8[4096]{0}', space=vmem, size = 0x1000, scoped, tag = 'output window, operand 1, single buffered']
    #allocation5 [shape = 's32[1]{0}', space=sflag, size = 0x4, scoped, tag = 'scoped memory for tpu_custom_call.1']
    %11 = vsyncpa [#allocation3], 0
    %12 = vsyncpa [#allocation5], 0
    // Predicated region
    $region2: #{tpu_custom_call.1} parent=1 // pred_check
      _
    $region3: #{tpu_custom_call.1} parent=1 // pred_check_branch
      %14 = sbr.rel (0) target = $region5
    $region4: #{tpu_custom_call.1} parent=1 // pred_region
      _
    $region5: #{tpu_custom_call.1} parent=1 // pred_fallthru
      _
    // Predicated region
    $region6: #{tpu_custom_call.1} parent=1 // pred_check
      _
    $region7: #{tpu_custom_call.1} parent=1 // pred_check_branch
      %16 = sbr.rel (0) target = $region9
    $region8: #{tpu_custom_call.1} parent=1 // pred_region
      _
    $region9: #{tpu_custom_call.1} parent=1 // pred_fallthru
      _
    // Predicated region
    $region10: #{tpu_custom_call.1} parent=1 // pred_check
      _
    $region11: #{tpu_custom_call.1} parent=1 // pred_check_branch
      %18 = sbr.rel (0) target = $region13
    $region12: #{tpu_custom_call.1} parent=1 // pred_region
      _
    $region13: #{tpu_custom_call.1} parent=1 // pred_fallthru
      _
    // Predicated region
    $region14: #{tpu_custom_call.1} parent=1 // pred_check
      _
    $region15: #{tpu_custom_call.1} parent=1 // pred_check_branch
      %20 = sbr.rel (0) target = $region17
    $region16: #{tpu_custom_call.1} parent=1 // pred_region
      _
    $region17: #{tpu_custom_call.1} parent=1 // pred_fallthru
      _
    %p21 = scmp.eq.s32.totalorder 0, 0
    // Predicated region
    $region18: #{tpu_custom_call.1} parent=1 // pred_check
      %p22 = pneg %p21
    $region19: #{tpu_custom_call.1} parent=1 // pred_check_branch
      %24 = sbr.rel (%p22) target = $region21
    $region20: #{tpu_custom_call.1} parent=1 // pred_region
      %25 = vst [vmem:[#allocation2] sm:$0xff] 0.0
      %26 = vst [vmem:[#allocation2 + $0x8] sm:$0xff] 0.0
      %27 = vst [vmem:[#allocation2 + $0x10] sm:$0xff] 0.0
      %28 = vst [vmem:[#allocation2 + $0x18] sm:$0xff] 0.0
      %29 = vst [vmem:[#allocation2 + $0x20] sm:$0xff] 0.0
      %30 = vst [vmem:[#allocation2 + $0x28] sm:$0xff] 0.0
      %31 = vst [vmem:[#allocation2 + $0x30] sm:$0xff] 0.0
      %32 = vst [vmem:[#allocation2 + $0x38] sm:$0xff] 0.0
      %33 = vst [vmem:[#allocation2 + $0x40] sm:$0xff] 0.0
      %34 = vst [vmem:[#allocation2 + $0x48] sm:$0xff] 0.0
      %35 = vst [vmem:[#allocation2 + $0x50] sm:$0xff] 0.0
      %36 = vst [vmem:[#allocation2 + $0x58] sm:$0xff] 0.0
      %37 = vst [vmem:[#allocation2 + $0x60] sm:$0xff] 0.0
      %38 = vst [vmem:[#allocation2 + $0x68] sm:$0xff] 0.0
      %39 = vst [vmem:[#allocation2 + $0x70] sm:$0xff] 0.0
      %40 = vst [vmem:[#allocation2 + $0x78] sm:$0xff] 0.0
    $region21: #{tpu_custom_call.1} parent=1 // pred_fallthru
      _
    %v41 = vld [vmem:[#allocation2] sm:$0xff]
    %v42 = vld [vmem:[#allocation2 + $0x8] sm:$0xff]
    %v43 = vld [vmem:[#allocation2 + $0x10] sm:$0xff]
    %v44 = vld [vmem:[#allocation2 + $0x18] sm:$0xff]
    %v45 = vld [vmem:[#allocation2 + $0x20] sm:$0xff]
    %v46 = vld [vmem:[#allocation2 + $0x28] sm:$0xff]
    %v47 = vld [vmem:[#allocation2 + $0x30] sm:$0xff]
    %v48 = vld [vmem:[#allocation2 + $0x38] sm:$0xff]
    %v49 = vld [vmem:[#allocation2 + $0x40] sm:$0xff]
    %v50 = vld [vmem:[#allocation2 + $0x48] sm:$0xff]
    %v51 = vld [vmem:[#allocation2 + $0x50] sm:$0xff]
    %v52 = vld [vmem:[#allocation2 + $0x58] sm:$0xff]
    %v53 = vld [vmem:[#allocation2 + $0x60] sm:$0xff]
    %v54 = vld [vmem:[#allocation2 + $0x68] sm:$0xff]
    %v55 = vld [vmem:[#allocation2 + $0x70] sm:$0xff]
    %v56 = vld [vmem:[#allocation2 + $0x78] sm:$0xff]
    %v57 = vld [vmem:[%s0] sm:$0xf]
    %v58 = vld [vmem:[%s0 + $0x4] sm:$0xf]
    %v59 = vld [vmem:[%s0 + $0x8] sm:$0xf]
    %v60 = vld [vmem:[%s0 + $0xc] sm:$0xf]
    %v61 = vld [vmem:[%s0 + $0x10] sm:$0xf]
    %v62 = vld [vmem:[%s0 + $0x14] sm:$0xf]
    %v63 = vld [vmem:[%s0 + $0x18] sm:$0xf]
    %v64 = vld [vmem:[%s0 + $0x1c] sm:$0xf]
    %v65 = vld [vmem:[%s0 + $0x20] sm:$0xf]
    %v66 = vld [vmem:[%s0 + $0x24] sm:$0xf]
    %v67 = vld [vmem:[%s0 + $0x28] sm:$0xf]
    %v68 = vld [vmem:[%s0 + $0x2c] sm:$0xf]
    %v69 = vld [vmem:[%s0 + $0x30] sm:$0xf]
    %v70 = vld [vmem:[%s0 + $0x34] sm:$0xf]
    %v71 = vld [vmem:[%s0 + $0x38] sm:$0xf]
    %v72 = vld [vmem:[%s0 + $0x3c] sm:$0xf]
    %v73 = vld [vmem:[%s1] sm:$0xf]
    %v74 = vld [vmem:[%s1 + $0x4] sm:$0xf]
    %v75 = vld [vmem:[%s1 + $0x8] sm:$0xf]
    %v76 = vld [vmem:[%s1 + $0xc] sm:$0xf]
    %v77 = vld [vmem:[%s1 + $0x10] sm:$0xf]
    %v78 = vld [vmem:[%s1 + $0x14] sm:$0xf]
    %v79 = vld [vmem:[%s1 + $0x18] sm:$0xf]
    %v80 = vld [vmem:[%s1 + $0x1c] sm:$0xf]
    %v81 = vld [vmem:[%s1 + $0x20] sm:$0xf]
    %v82 = vld [vmem:[%s1 + $0x24] sm:$0xf]
    %v83 = vld [vmem:[%s1 + $0x28] sm:$0xf]
    %v84 = vld [vmem:[%s1 + $0x2c] sm:$0xf]
    %v85 = vld [vmem:[%s1 + $0x30] sm:$0xf]
    %v86 = vld [vmem:[%s1 + $0x34] sm:$0xf]
    %v87 = vld [vmem:[%s1 + $0x38] sm:$0xf]
    %v88 = vld [vmem:[%s1 + $0x3c] sm:$0xf]
    %v105 = vunpack.c.l.b16 %v57
    %v106 = vunpack.c.l.b16 %v58
    %v107 = vunpack.c.l.b16 %v59
    %v108 = vunpack.c.l.b16 %v60
    %v109 = vunpack.c.l.b16 %v61
    %v110 = vunpack.c.l.b16 %v62
    %v111 = vunpack.c.l.b16 %v63
    %v112 = vunpack.c.l.b16 %v64
    %v113 = vunpack.c.l.b16 %v65
    %v114 = vunpack.c.l.b16 %v66
    %v115 = vunpack.c.l.b16 %v67
    %v116 = vunpack.c.l.b16 %v68
    %v117 = vunpack.c.l.b16 %v69
    %v118 = vunpack.c.l.b16 %v70
    %v119 = vunpack.c.l.b16 %v71
    %v120 = vunpack.c.l.b16 %v72
    %v121 = vpack.c.b16 %v106, %v105
    %v122 = vpack.c.b16 %v108, %v107
    %v123 = vpack.c.b16 %v110, %v109
    %v124 = vpack.c.b16 %v112, %v111
    %v125 = vpack.c.b16 %v114, %v113
    %v126 = vpack.c.b16 %v116, %v115
    %v127 = vpack.c.b16 %v118, %v117
    %v128 = vpack.c.b16 %v120, %v119
    %v153 = vunpack.c.l.b16 %v73
    %v154 = vunpack.c.l.b16 %v74
    %v155 = vunpack.c.l.b16 %v75
    %v156 = vunpack.c.l.b16 %v76
    %v157 = vunpack.c.l.b16 %v77
    %v158 = vunpack.c.l.b16 %v78
    %v159 = vunpack.c.l.b16 %v79
    %v160 = vunpack.c.l.b16 %v80
    %v161 = vunpack.c.l.b16 %v81
    %v162 = vunpack.c.l.b16 %v82
    %v163 = vunpack.c.l.b16 %v83
    %v164 = vunpack.c.l.b16 %v84
    %v165 = vunpack.c.l.b16 %v85
    %v166 = vunpack.c.l.b16 %v86
    %v167 = vunpack.c.l.b16 %v87
    %v168 = vunpack.c.l.b16 %v88
    %v169 = vpack.c.b16 %v154, %v153
    %v170 = vpack.c.b16 %v156, %v155
    %v171 = vpack.c.b16 %v158, %v157
    %v172 = vpack.c.b16 %v160, %v159
    %v173 = vpack.c.b16 %v162, %v161
    %v174 = vpack.c.b16 %v164, %v163
    %v175 = vpack.c.b16 %v166, %v165
    %v176 = vpack.c.b16 %v168, %v167
    %185 = vmatpush.bf16.msra.mxu0 %v176
    %186 = vmatpush.bf16.msra.mxu0 %v175
    %187 = vmatpush.bf16.msra.mxu0 %v174
    %188 = vmatpush.bf16.msra.mxu0 %v173
    %189 = vmatpush.bf16.msra.mxu0 %v172
    %190 = vmatpush.bf16.msra.mxu0 %v171
    %191 = vmatpush.bf16.msra.mxu0 %v170
    %192 = vmatpush.bf16.msra.mxu0 %v169
    %193 = vmatmul.bf16.gmra.mxu0 %v121
    %v194 = vpop.f32.mrf.mxu0
    %v195 = vadd.f32 0.0, %v194
    %v196 = vpop.f32.mrf.mxu0
    %v197 = vadd.f32 0.0, %v196
    %198 = vmatmul.bf16.gmra.mxu0 %v122
    %v199 = vpop.f32.mrf.mxu0
    %v200 = vadd.f32 0.0, %v199
    %v201 = vpop.f32.mrf.mxu0
    %v202 = vadd.f32 0.0, %v201
    %203 = vmatmul.bf16.gmra.mxu0 %v123
    %v204 = vpop.f32.mrf.mxu0
    %v205 = vadd.f32 0.0, %v204
    %v206 = vpop.f32.mrf.mxu0
    %v207 = vadd.f32 0.0, %v206
    %208 = vmatmul.bf16.gmra.mxu0 %v124
    %v209 = vpop.f32.mrf.mxu0
    %v210 = vadd.f32 0.0, %v209
    %v211 = vpop.f32.mrf.mxu0
    %v212 = vadd.f32 0.0, %v211
    %213 = vmatmul.bf16.gmra.mxu0 %v125
    %v214 = vpop.f32.mrf.mxu0
    %v215 = vadd.f32 0.0, %v214
    %v216 = vpop.f32.mrf.mxu0
    %v217 = vadd.f32 0.0, %v216
    %218 = vmatmul.bf16.gmra.mxu0 %v126
    %v219 = vpop.f32.mrf.mxu0
    %v220 = vadd.f32 0.0, %v219
    %v221 = vpop.f32.mrf.mxu0
    %v222 = vadd.f32 0.0, %v221
    %223 = vmatmul.bf16.gmra.mxu0 %v127
    %v224 = vpop.f32.mrf.mxu0
    %v225 = vadd.f32 0.0, %v224
    %v226 = vpop.f32.mrf.mxu0
    %v227 = vadd.f32 0.0, %v226
    %228 = vmatmul.bf16.gmra.mxu0 %v128
    %v229 = vpop.f32.mrf.mxu0
    %v230 = vadd.f32 0.0, %v229
    %v231 = vpop.f32.mrf.mxu0
    %v232 = vadd.f32 0.0, %v231
    %233 = vdwg.mxu0
    %v234 = vadd.f32 %v41, %v195
    %v235 = vadd.f32 %v42, %v197
    %v236 = vadd.f32 %v43, %v200
    %v237 = vadd.f32 %v44, %v202
    %v238 = vadd.f32 %v45, %v205
    %v239 = vadd.f32 %v46, %v207
    %v240 = vadd.f32 %v47, %v210
    %v241 = vadd.f32 %v48, %v212
    %v242 = vadd.f32 %v49, %v215
    %v243 = vadd.f32 %v50, %v217
    %v244 = vadd.f32 %v51, %v220
    %v245 = vadd.f32 %v52, %v222
    %v246 = vadd.f32 %v53, %v225
    %v247 = vadd.f32 %v54, %v227
    %v248 = vadd.f32 %v55, %v230
    %v249 = vadd.f32 %v56, %v232
    %250 = vst [vmem:[#allocation2] sm:$0xff] %v234
    %251 = vst [vmem:[#allocation2 + $0x8] sm:$0xff] %v235
    %252 = vst [vmem:[#allocation2 + $0x10] sm:$0xff] %v236
    %253 = vst [vmem:[#allocation2 + $0x18] sm:$0xff] %v237
    %254 = vst [vmem:[#allocation2 + $0x20] sm:$0xff] %v238
    %255 = vst [vmem:[#allocation2 + $0x28] sm:$0xff] %v239
    %256 = vst [vmem:[#allocation2 + $0x30] sm:$0xff] %v240
    %257 = vst [vmem:[#allocation2 + $0x38] sm:$0xff] %v241
    %258 = vst [vmem:[#allocation2 + $0x40] sm:$0xff] %v242
    %259 = vst [vmem:[#allocation2 + $0x48] sm:$0xff] %v243
    %260 = vst [vmem:[#allocation2 + $0x50] sm:$0xff] %v244
    %261 = vst [vmem:[#allocation2 + $0x58] sm:$0xff] %v245
    %262 = vst [vmem:[#allocation2 + $0x60] sm:$0xff] %v246
    %263 = vst [vmem:[#allocation2 + $0x68] sm:$0xff] %v247
    %264 = vst [vmem:[#allocation2 + $0x70] sm:$0xff] %v248
    %265 = vst [vmem:[#allocation2 + $0x78] sm:$0xff] %v249
    // Predicated region
    $region22: #{tpu_custom_call.1} parent=1 // pred_check
      %p266 = pneg %p21
    $region23: #{tpu_custom_call.1} parent=1 // pred_check_branch
      %268 = sbr.rel (%p266) target = $region25
    $region24: #{tpu_custom_call.1} parent=1 // pred_region
      %v269 = vld [vmem:[#allocation2] sm:$0xff]
      %v270 = vld [vmem:[#allocation2 + $0x8] sm:$0xff]
      %v271 = vld [vmem:[#allocation2 + $0x10] sm:$0xff]
      %v272 = vld [vmem:[#allocation2 + $0x18] sm:$0xff]
      %v273 = vld [vmem:[#allocation2 + $0x20] sm:$0xff]
      %v274 = vld [vmem:[#allocation2 + $0x28] sm:$0xff]
      %v275 = vld [vmem:[#allocation2 + $0x30] sm:$0xff]
      %v276 = vld [vmem:[#allocation2 + $0x38] sm:$0xff]
      %v277 = vld [vmem:[#allocation2 + $0x40] sm:$0xff]
      %v278 = vld [vmem:[#allocation2 + $0x48] sm:$0xff]
      %v279 = vld [vmem:[#allocation2 + $0x50] sm:$0xff]
      %v280 = vld [vmem:[#allocation2 + $0x58] sm:$0xff]
      %v281 = vld [vmem:[#allocation2 + $0x60] sm:$0xff]
      %v282 = vld [vmem:[#allocation2 + $0x68] sm:$0xff]
      %v283 = vld [vmem:[#allocation2 + $0x70] sm:$0xff]
      %v284 = vld [vmem:[#allocation2 + $0x78] sm:$0xff]
      %v285 = vld [vmem:[%s2] sm:$0x1]
      %v287 = vperm.slane %v285, 0
      %v289 = vadd.f32 %v269, %v287
      %v290 = vadd.f32 %v270, %v287
      %v291 = vadd.f32 %v271, %v287
      %v292 = vadd.f32 %v272, %v287
      %v293 = vadd.f32 %v273, %v287
      %v294 = vadd.f32 %v274, %v287
      %v295 = vadd.f32 %v275, %v287
      %v296 = vadd.f32 %v276, %v287
      %v297 = vadd.f32 %v277, %v287
      %v298 = vadd.f32 %v278, %v287
      %v299 = vadd.f32 %v279, %v287
      %v300 = vadd.f32 %v280, %v287
      %v301 = vadd.f32 %v281, %v287
      %v302 = vadd.f32 %v282, %v287
      %v303 = vadd.f32 %v283, %v287
      %v304 = vadd.f32 %v284, %v287
      %v305 = vmax.f32 %v289, 0.0
      %v306 = vmax.f32 %v290, 0.0
      %v307 = vmax.f32 %v291, 0.0
      %v308 = vmax.f32 %v292, 0.0
      %v309 = vmax.f32 %v293, 0.0
      %v310 = vmax.f32 %v294, 0.0
      %v311 = vmax.f32 %v295, 0.0
      %v312 = vmax.f32 %v296, 0.0
      %v313 = vmax.f32 %v297, 0.0
      %v314 = vmax.f32 %v298, 0.0
      %v315 = vmax.f32 %v299, 0.0
      %v316 = vmax.f32 %v300, 0.0
      %v317 = vmax.f32 %v301, 0.0
      %v318 = vmax.f32 %v302, 0.0
      %v319 = vmax.f32 %v303, 0.0
      %v320 = vmax.f32 %v304, 0.0
      %321 = vst [vmem:[#allocation2] sm:$0xff] %v305
      %322 = vst [vmem:[#allocation2 + $0x8] sm:$0xff] %v306
      %323 = vst [vmem:[#allocation2 + $0x10] sm:$0xff] %v307
      %324 = vst [vmem:[#allocation2 + $0x18] sm:$0xff] %v308
      %325 = vst [vmem:[#allocation2 + $0x20] sm:$0xff] %v309
      %326 = vst [vmem:[#allocation2 + $0x28] sm:$0xff] %v310
      %327 = vst [vmem:[#allocation2 + $0x30] sm:$0xff] %v311
      %328 = vst [vmem:[#allocation2 + $0x38] sm:$0xff] %v312
      %329 = vst [vmem:[#allocation2 + $0x40] sm:$0xff] %v313
      %330 = vst [vmem:[#allocation2 + $0x48] sm:$0xff] %v314
      %331 = vst [vmem:[#allocation2 + $0x50] sm:$0xff] %v315
      %332 = vst [vmem:[#allocation2 + $0x58] sm:$0xff] %v316
      %333 = vst [vmem:[#allocation2 + $0x60] sm:$0xff] %v317
      %334 = vst [vmem:[#allocation2 + $0x68] sm:$0xff] %v318
      %335 = vst [vmem:[#allocation2 + $0x70] sm:$0xff] %v319
      %336 = vst [vmem:[#allocation2 + $0x78] sm:$0xff] %v320
      %v337 = vld [vmem:[%s3] sm:$0xff]
      %v338 = vld [vmem:[%s3 + $0x8] sm:$0xff]
      %v339 = vld [vmem:[%s3 + $0x10] sm:$0xff]
      %v340 = vld [vmem:[%s3 + $0x18] sm:$0xff]
      %v341 = vld [vmem:[%s3 + $0x20] sm:$0xff]
      %v342 = vld [vmem:[%s3 + $0x28] sm:$0xff]
      %v343 = vld [vmem:[%s3 + $0x30] sm:$0xff]
      %v344 = vld [vmem:[%s3 + $0x38] sm:$0xff]
      %v345 = vld [vmem:[%s3 + $0x40] sm:$0xff]
      %v346 = vld [vmem:[%s3 + $0x48] sm:$0xff]
      %v347 = vld [vmem:[%s3 + $0x50] sm:$0xff]
      %v348 = vld [vmem:[%s3 + $0x58] sm:$0xff]
      %v349 = vld [vmem:[%s3 + $0x60] sm:$0xff]
      %v350 = vld [vmem:[%s3 + $0x68] sm:$0xff]
      %v351 = vld [vmem:[%s3 + $0x70] sm:$0xff]
      %v352 = vld [vmem:[%s3 + $0x78] sm:$0xff]
      %354 = vset.pattern.permute.xlu0 0
      %355 = vperm.xlu0 %354, %v337
      %v356 = vpop.permute.xlu0 %355
      %359 = vset.pattern.permute.xlu0 0
      %360 = vperm.xlu0 %359, %v338
      %v361 = vpop.permute.xlu0 %360
      %364 = vset.pattern.permute.xlu0 0
      %365 = vperm.xlu0 %364, %v339
      %v366 = vpop.permute.xlu0 %365
      %369 = vset.pattern.permute.xlu0 0
      %370 = vperm.xlu0 %369, %v340
      %v371 = vpop.permute.xlu0 %370
      %374 = vset.pattern.permute.xlu0 0
      %375 = vperm.xlu0 %374, %v341
      %v376 = vpop.permute.xlu0 %375
      %379 = vset.pattern.permute.xlu0 0
      %380 = vperm.xlu0 %379, %v342
      %v381 = vpop.permute.xlu0 %380
      %384 = vset.pattern.permute.xlu0 0
      %385 = vperm.xlu0 %384, %v343
      %v386 = vpop.permute.xlu0 %385
      %389 = vset.pattern.permute.xlu0 0
      %390 = vperm.xlu0 %389, %v344
      %v391 = vpop.permute.xlu0 %390
      %394 = vset.pattern.permute.xlu0 0
      %395 = vperm.xlu0 %394, %v345
      %v396 = vpop.permute.xlu0 %395
      %399 = vset.pattern.permute.xlu0 0
      %400 = vperm.xlu0 %399, %v346
      %v401 = vpop.permute.xlu0 %400
      %404 = vset.pattern.permute.xlu0 0
      %405 = vperm.xlu0 %404, %v347
      %v406 = vpop.permute.xlu0 %405
      %409 = vset.pattern.permute.xlu0 0
      %410 = vperm.xlu0 %409, %v348
      %v411 = vpop.permute.xlu0 %410
      %414 = vset.pattern.permute.xlu0 0
      %415 = vperm.xlu0 %414, %v349
      %v416 = vpop.permute.xlu0 %415
      %419 = vset.pattern.permute.xlu0 0
      %420 = vperm.xlu0 %419, %v350
      %v421 = vpop.permute.xlu0 %420
      %424 = vset.pattern.permute.xlu0 0
      %425 = vperm.xlu0 %424, %v351
      %v426 = vpop.permute.xlu0 %425
      %429 = vset.pattern.permute.xlu0 0
      %430 = vperm.xlu0 %429, %v352
      %v431 = vpop.permute.xlu0 %430
      %v433 = vmul.f32 %v305, %v356
      %v434 = vmul.f32 %v306, %v361
      %v435 = vmul.f32 %v307, %v366
      %v436 = vmul.f32 %v308, %v371
      %v437 = vmul.f32 %v309, %v376
      %v438 = vmul.f32 %v310, %v381
      %v439 = vmul.f32 %v311, %v386
      %v440 = vmul.f32 %v312, %v391
      %v441 = vmul.f32 %v313, %v396
      %v442 = vmul.f32 %v314, %v401
      %v443 = vmul.f32 %v315, %v406
      %v444 = vmul.f32 %v316, %v411
      %v445 = vmul.f32 %v317, %v416
      %v446 = vmul.f32 %v318, %v421
      %v447 = vmul.f32 %v319, %v426
      %v448 = vmul.f32 %v320, %v431
      %v449 = vmax.f32 %v433, %v437
      %v450 = vmax.f32 %v434, %v438
      %v451 = vmax.f32 %v435, %v439
      %v452 = vmax.f32 %v436, %v440
      %v453 = vmax.f32 %v449, %v441
      %v454 = vmax.f32 %v450, %v442
      %v455 = vmax.f32 %v451, %v443
      %v456 = vmax.f32 %v452, %v444
      %v457 = vmax.f32 %v453, %v445
      %v458 = vmax.f32 %v454, %v446
      %v459 = vmax.f32 %v455, %v447
      %v460 = vmax.f32 %v456, %v448
      %v461 = vmax.f32 %v457, %v458
      %v462 = vmax.f32 %v459, %v460
      %v463 = vmax.f32 %v461, %v462
      %v464 = vrot.slane %v463, 4
      %v465 = vmax.f32 %v463, %v464
      %v466 = vrot.slane %v465, 2
      %v467 = vmax.f32 %v465, %v466
      %v468 = vrot.slane %v467, 1
      %v469 = vmax.f32 %v467, %v468
      %470 = vset.pattern.permute.xlu0 1
      %471 = vperm.xlu0 %470, %v337
      %v472 = vpop.permute.xlu0 %471
      %474 = vset.pattern.permute.xlu0 1
      %475 = vperm.xlu0 %474, %v338
      %v476 = vpop.permute.xlu0 %475
      %478 = vset.pattern.permute.xlu0 1
      %479 = vperm.xlu0 %478, %v339
      %v480 = vpop.permute.xlu0 %479
      %482 = vset.pattern.permute.xlu0 1
      %483 = vperm.xlu0 %482, %v340
      %v484 = vpop.permute.xlu0 %483
      %486 = vset.pattern.permute.xlu0 1
      %487 = vperm.xlu0 %486, %v341
      %v488 = vpop.permute.xlu0 %487
      %490 = vset.pattern.permute.xlu0 1
      %491 = vperm.xlu0 %490, %v342
      %v492 = vpop.permute.xlu0 %491
      %494 = vset.pattern.permute.xlu0 1
      %495 = vperm.xlu0 %494, %v343
      %v496 = vpop.permute.xlu0 %495
      %498 = vset.pattern.permute.xlu0 1
      %499 = vperm.xlu0 %498, %v344
      %v500 = vpop.permute.xlu0 %499
      %502 = vset.pattern.permute.xlu0 1
      %503 = vperm.xlu0 %502, %v345
      %v504 = vpop.permute.xlu0 %503
      %506 = vset.pattern.permute.xlu0 1
      %507 = vperm.xlu0 %506, %v346
      %v508 = vpop.permute.xlu0 %507
      %510 = vset.pattern.permute.xlu0 1
      %511 = vperm.xlu0 %510, %v347
      %v512 = vpop.permute.xlu0 %511
      %514 = vset.pattern.permute.xlu0 1
      %515 = vperm.xlu0 %514, %v348
      %v516 = vpop.permute.xlu0 %515
      %518 = vset.pattern.permute.xlu0 1
      %519 = vperm.xlu0 %518, %v349
      %v520 = vpop.permute.xlu0 %519
      %522 = vset.pattern.permute.xlu0 1
      %523 = vperm.xlu0 %522, %v350
      %v524 = vpop.permute.xlu0 %523
      %526 = vset.pattern.permute.xlu0 1
      %527 = vperm.xlu0 %526, %v351
      %v528 = vpop.permute.xlu0 %527
      %530 = vset.pattern.permute.xlu0 1
      %531 = vperm.xlu0 %530, %v352
      %v532 = vpop.permute.xlu0 %531
      %v534 = vmul.f32 %v305, %v472
      %v535 = vmul.f32 %v306, %v476
      %v536 = vmul.f32 %v307, %v480
      %v537 = vmul.f32 %v308, %v484
      %v538 = vmul.f32 %v309, %v488
      %v539 = vmul.f32 %v310, %v492
      %v540 = vmul.f32 %v311, %v496
      %v541 = vmul.f32 %v312, %v500
      %v542 = vmul.f32 %v313, %v504
      %v543 = vmul.f32 %v314, %v508
      %v544 = vmul.f32 %v315, %v512
      %v545 = vmul.f32 %v316, %v516
      %v546 = vmul.f32 %v317, %v520
      %v547 = vmul.f32 %v318, %v524
      %v548 = vmul.f32 %v319, %v528
      %v549 = vmul.f32 %v320, %v532
      %v550 = vmax.f32 %v534, %v538
      %v551 = vmax.f32 %v535, %v539
      %v552 = vmax.f32 %v536, %v540
      %v553 = vmax.f32 %v537, %v541
      %v554 = vmax.f32 %v550, %v542
      %v555 = vmax.f32 %v551, %v543
      %v556 = vmax.f32 %v552, %v544
      %v557 = vmax.f32 %v553, %v545
      %v558 = vmax.f32 %v554, %v546
      %v559 = vmax.f32 %v555, %v547
      %v560 = vmax.f32 %v556, %v548
      %v561 = vmax.f32 %v557, %v549
      %v562 = vmax.f32 %v558, %v559
      %v563 = vmax.f32 %v560, %v561
      %v564 = vmax.f32 %v562, %v563
      %v565 = vrot.slane %v564, 4
      %v566 = vmax.f32 %v564, %v565
      %v567 = vrot.slane %v566, 2
      %v568 = vmax.f32 %v566, %v567
      %v569 = vrot.slane %v568, 1
      %v570 = vmax.f32 %v568, %v569
      %571 = vset.pattern.permute.xlu0 2
      %572 = vperm.xlu0 %571, %v337
      %v573 = vpop.permute.xlu0 %572
      %575 = vset.pattern.permute.xlu0 2
      %576 = vperm.xlu0 %575, %v338
      %v577 = vpop.permute.xlu0 %576
      %579 = vset.pattern.permute.xlu0 2
      %580 = vperm.xlu0 %579, %v339
      %v581 = vpop.permute.xlu0 %580
      %583 = vset.pattern.permute.xlu0 2
      %584 = vperm.xlu0 %583, %v340
      %v585 = vpop.permute.xlu0 %584
      %587 = vset.pattern.permute.xlu0 2
      %588 = vperm.xlu0 %587, %v341
      %v589 = vpop.permute.xlu0 %588
      %591 = vset.pattern.permute.xlu0 2
      %592 = vperm.xlu0 %591, %v342
      %v593 = vpop.permute.xlu0 %592
      %595 = vset.pattern.permute.xlu0 2
      %596 = vperm.xlu0 %595, %v343
      %v597 = vpop.permute.xlu0 %596
      %599 = vset.pattern.permute.xlu0 2
      %600 = vperm.xlu0 %599, %v344
      %v601 = vpop.permute.xlu0 %600
      %603 = vset.pattern.permute.xlu0 2
      %604 = vperm.xlu0 %603, %v345
      %v605 = vpop.permute.xlu0 %604
      %607 = vset.pattern.permute.xlu0 2
      %608 = vperm.xlu0 %607, %v346
      %v609 = vpop.permute.xlu0 %608
      %611 = vset.pattern.permute.xlu0 2
      %612 = vperm.xlu0 %611, %v347
      %v613 = vpop.permute.xlu0 %612
      %615 = vset.pattern.permute.xlu0 2
      %616 = vperm.xlu0 %615, %v348
      %v617 = vpop.permute.xlu0 %616
      %619 = vset.pattern.permute.xlu0 2
      %620 = vperm.xlu0 %619, %v349
      %v621 = vpop.permute.xlu0 %620
      %623 = vset.pattern.permute.xlu0 2
      %624 = vperm.xlu0 %623, %v350
      %v625 = vpop.permute.xlu0 %624
      %627 = vset.pattern.permute.xlu0 2
      %628 = vperm.xlu0 %627, %v351
      %v629 = vpop.permute.xlu0 %628
      %631 = vset.pattern.permute.xlu0 2
      %632 = vperm.xlu0 %631, %v352
      %v633 = vpop.permute.xlu0 %632
      %v635 = vmul.f32 %v305, %v573
      %v636 = vmul.f32 %v306, %v577
      %v637 = vmul.f32 %v307, %v581
      %v638 = vmul.f32 %v308, %v585
      %v639 = vmul.f32 %v309, %v589
      %v640 = vmul.f32 %v310, %v593
      %v641 = vmul.f32 %v311, %v597
      %v642 = vmul.f32 %v312, %v601
      %v643 = vmul.f32 %v313, %v605
      %v644 = vmul.f32 %v314, %v609
      %v645 = vmul.f32 %v315, %v613
      %v646 = vmul.f32 %v316, %v617
      %v647 = vmul.f32 %v317, %v621
      %v648 = vmul.f32 %v318, %v625
      %v649 = vmul.f32 %v319, %v629
      %v650 = vmul.f32 %v320, %v633
      %v651 = vmax.f32 %v635, %v639
      %v652 = vmax.f32 %v636, %v640
      %v653 = vmax.f32 %v637, %v641
      %v654 = vmax.f32 %v638, %v642
      %v655 = vmax.f32 %v651, %v643
      %v656 = vmax.f32 %v652, %v644
      %v657 = vmax.f32 %v653, %v645
      %v658 = vmax.f32 %v654, %v646
      %v659 = vmax.f32 %v655, %v647
      %v660 = vmax.f32 %v656, %v648
      %v661 = vmax.f32 %v657, %v649
      %v662 = vmax.f32 %v658, %v650
      %v663 = vmax.f32 %v659, %v660
      %v664 = vmax.f32 %v661, %v662
      %v665 = vmax.f32 %v663, %v664
      %v666 = vrot.slane %v665, 4
      %v667 = vmax.f32 %v665, %v666
      %v668 = vrot.slane %v667, 2
      %v669 = vmax.f32 %v667, %v668
      %v670 = vrot.slane %v669, 1
      %v671 = vmax.f32 %v669, %v670
      %672 = vset.pattern.permute.xlu0 3
      %673 = vperm.xlu0 %672, %v337
      %v674 = vpop.permute.xlu0 %673
      %676 = vset.pattern.permute.xlu0 3
      %677 = vperm.xlu0 %676, %v338
      %v678 = vpop.permute.xlu0 %677
      %680 = vset.pattern.permute.xlu0 3
      %681 = vperm.xlu0 %680, %v339
      %v682 = vpop.permute.xlu0 %681
      %684 = vset.pattern.permute.xlu0 3
      %685 = vperm.xlu0 %684, %v340
      %v686 = vpop.permute.xlu0 %685
      %688 = vset.pattern.permute.xlu0 3
      %689 = vperm.xlu0 %688, %v341
      %v690 = vpop.permute.xlu0 %689
      %692 = vset.pattern.permute.xlu0 3
      %693 = vperm.xlu0 %692, %v342
      %v694 = vpop.permute.xlu0 %693
      %696 = vset.pattern.permute.xlu0 3
      %697 = vperm.xlu0 %696, %v343
      %v698 = vpop.permute.xlu0 %697
      %700 = vset.pattern.permute.xlu0 3
      %701 = vperm.xlu0 %700, %v344
      %v702 = vpop.permute.xlu0 %701
      %704 = vset.pattern.permute.xlu0 3
      %705 = vperm.xlu0 %704, %v345
      %v706 = vpop.permute.xlu0 %705
      %708 = vset.pattern.permute.xlu0 3
      %709 = vperm.xlu0 %708, %v346
      %v710 = vpop.permute.xlu0 %709
      %712 = vset.pattern.permute.xlu0 3
      %713 = vperm.xlu0 %712, %v347
      %v714 = vpop.permute.xlu0 %713
      %716 = vset.pattern.permute.xlu0 3
      %717 = vperm.xlu0 %716, %v348
      %v718 = vpop.permute.xlu0 %717
      %720 = vset.pattern.permute.xlu0 3
      %721 = vperm.xlu0 %720, %v349
      %v722 = vpop.permute.xlu0 %721
      %724 = vset.pattern.permute.xlu0 3
      %725 = vperm.xlu0 %724, %v350
      %v726 = vpop.permute.xlu0 %725
      %728 = vset.pattern.permute.xlu0 3
      %729 = vperm.xlu0 %728, %v351
      %v730 = vpop.permute.xlu0 %729
      %732 = vset.pattern.permute.xlu0 3
      %733 = vperm.xlu0 %732, %v352
      %v734 = vpop.permute.xlu0 %733
      %v736 = vmul.f32 %v305, %v674
      %v737 = vmul.f32 %v306, %v678
      %v738 = vmul.f32 %v307, %v682
      %v739 = vmul.f32 %v308, %v686
      %v740 = vmul.f32 %v309, %v690
      %v741 = vmul.f32 %v310, %v694
      %v742 = vmul.f32 %v311, %v698
      %v743 = vmul.f32 %v312, %v702
      %v744 = vmul.f32 %v313, %v706
      %v745 = vmul.f32 %v314, %v710
      %v746 = vmul.f32 %v315, %v714
      %v747 = vmul.f32 %v316, %v718
      %v748 = vmul.f32 %v317, %v722
      %v749 = vmul.f32 %v318, %v726
      %v750 = vmul.f32 %v319, %v730
      %v751 = vmul.f32 %v320, %v734
      %v752 = vmax.f32 %v736, %v740
      %v753 = vmax.f32 %v737, %v741
      %v754 = vmax.f32 %v738, %v742
      %v755 = vmax.f32 %v739, %v743
      %v756 = vmax.f32 %v752, %v744
      %v757 = vmax.f32 %v753, %v745
      %v758 = vmax.f32 %v754, %v746
      %v759 = vmax.f32 %v755, %v747
      %v760 = vmax.f32 %v756, %v748
      %v761 = vmax.f32 %v757, %v749
      %v762 = vmax.f32 %v758, %v750
      %v763 = vmax.f32 %v759, %v751
      %v764 = vmax.f32 %v760, %v761
      %v765 = vmax.f32 %v762, %v763
      %v766 = vmax.f32 %v764, %v765
      %v767 = vrot.slane %v766, 4
      %v768 = vmax.f32 %v766, %v767
      %v769 = vrot.slane %v768, 2
      %v770 = vmax.f32 %v768, %v769
      %v771 = vrot.slane %v770, 1
      %v772 = vmax.f32 %v770, %v771
      %773 = vset.pattern.permute.xlu0 4
      %774 = vperm.xlu0 %773, %v337
      %v775 = vpop.permute.xlu0 %774
      %777 = vset.pattern.permute.xlu0 4
      %778 = vperm.xlu0 %777, %v338
      %v779 = vpop.permute.xlu0 %778
      %781 = vset.pattern.permute.xlu0 4
      %782 = vperm.xlu0 %781, %v339
      %v783 = vpop.permute.xlu0 %782
      %785 = vset.pattern.permute.xlu0 4
      %786 = vperm.xlu0 %785, %v340
      %v787 = vpop.permute.xlu0 %786
      %789 = vset.pattern.permute.xlu0 4
      %790 = vperm.xlu0 %789, %v341
      %v791 = vpop.permute.xlu0 %790
      %793 = vset.pattern.permute.xlu0 4
      %794 = vperm.xlu0 %793, %v342
      %v795 = vpop.permute.xlu0 %794
      %797 = vset.pattern.permute.xlu0 4
      %798 = vperm.xlu0 %797, %v343
      %v799 = vpop.permute.xlu0 %798
      %801 = vset.pattern.permute.xlu0 4
      %802 = vperm.xlu0 %801, %v344
      %v803 = vpop.permute.xlu0 %802
      %805 = vset.pattern.permute.xlu0 4
      %806 = vperm.xlu0 %805, %v345
      %v807 = vpop.permute.xlu0 %806
      %809 = vset.pattern.permute.xlu0 4
      %810 = vperm.xlu0 %809, %v346
      %v811 = vpop.permute.xlu0 %810
      %813 = vset.pattern.permute.xlu0 4
      %814 = vperm.xlu0 %813, %v347
      %v815 = vpop.permute.xlu0 %814
      %817 = vset.pattern.permute.xlu0 4
      %818 = vperm.xlu0 %817, %v348
      %v819 = vpop.permute.xlu0 %818
      %821 = vset.pattern.permute.xlu0 4
      %822 = vperm.xlu0 %821, %v349
      %v823 = vpop.permute.xlu0 %822
      %825 = vset.pattern.permute.xlu0 4
      %826 = vperm.xlu0 %825, %v350
      %v827 = vpop.permute.xlu0 %826
      %829 = vset.pattern.permute.xlu0 4
      %830 = vperm.xlu0 %829, %v351
      %v831 = vpop.permute.xlu0 %830
      %833 = vset.pattern.permute.xlu0 4
      %834 = vperm.xlu0 %833, %v352
      %v835 = vpop.permute.xlu0 %834
      %v837 = vmul.f32 %v305, %v775
      %v838 = vmul.f32 %v306, %v779
      %v839 = vmul.f32 %v307, %v783
      %v840 = vmul.f32 %v308, %v787
      %v841 = vmul.f32 %v309, %v791
      %v842 = vmul.f32 %v310, %v795
      %v843 = vmul.f32 %v311, %v799
      %v844 = vmul.f32 %v312, %v803
      %v845 = vmul.f32 %v313, %v807
      %v846 = vmul.f32 %v314, %v811
      %v847 = vmul.f32 %v315, %v815
      %v848 = vmul.f32 %v316, %v819
      %v849 = vmul.f32 %v317, %v823
      %v850 = vmul.f32 %v318, %v827
      %v851 = vmul.f32 %v319, %v831
      %v852 = vmul.f32 %v320, %v835
      %v853 = vmax.f32 %v837, %v841
      %v854 = vmax.f32 %v838, %v842
      %v855 = vmax.f32 %v839, %v843
      %v856 = vmax.f32 %v840, %v844
      %v857 = vmax.f32 %v853, %v845
      %v858 = vmax.f32 %v854, %v846
      %v859 = vmax.f32 %v855, %v847
      %v860 = vmax.f32 %v856, %v848
      %v861 = vmax.f32 %v857, %v849
      %v862 = vmax.f32 %v858, %v850
      %v863 = vmax.f32 %v859, %v851
      %v864 = vmax.f32 %v860, %v852
      %v865 = vmax.f32 %v861, %v862
      %v866 = vmax.f32 %v863, %v864
      %v867 = vmax.f32 %v865, %v866
      %v868 = vrot.slane %v867, 4
      %v869 = vmax.f32 %v867, %v868
      %v870 = vrot.slane %v869, 2
      %v871 = vmax.f32 %v869, %v870
      %v872 = vrot.slane %v871, 1
      %v873 = vmax.f32 %v871, %v872
      %874 = vset.pattern.permute.xlu0 5
      %875 = vperm.xlu0 %874, %v337
      %v876 = vpop.permute.xlu0 %875
      %878 = vset.pattern.permute.xlu0 5
      %879 = vperm.xlu0 %878, %v338
      %v880 = vpop.permute.xlu0 %879
      %882 = vset.pattern.permute.xlu0 5
      %883 = vperm.xlu0 %882, %v339
      %v884 = vpop.permute.xlu0 %883
      %886 = vset.pattern.permute.xlu0 5
      %887 = vperm.xlu0 %886, %v340
      %v888 = vpop.permute.xlu0 %887
      %890 = vset.pattern.permute.xlu0 5
      %891 = vperm.xlu0 %890, %v341
      %v892 = vpop.permute.xlu0 %891
      %894 = vset.pattern.permute.xlu0 5
      %895 = vperm.xlu0 %894, %v342
      %v896 = vpop.permute.xlu0 %895
      %898 = vset.pattern.permute.xlu0 5
      %899 = vperm.xlu0 %898, %v343
      %v900 = vpop.permute.xlu0 %899
      %902 = vset.pattern.permute.xlu0 5
      %903 = vperm.xlu0 %902, %v344
      %v904 = vpop.permute.xlu0 %903
      %906 = vset.pattern.permute.xlu0 5
      %907 = vperm.xlu0 %906, %v345
      %v908 = vpop.permute.xlu0 %907
      %910 = vset.pattern.permute.xlu0 5
      %911 = vperm.xlu0 %910, %v346
      %v912 = vpop.permute.xlu0 %911
      %914 = vset.pattern.permute.xlu0 5
      %915 = vperm.xlu0 %914, %v347
      %v916 = vpop.permute.xlu0 %915
      %918 = vset.pattern.permute.xlu0 5
      %919 = vperm.xlu0 %918, %v348
      %v920 = vpop.permute.xlu0 %919
      %922 = vset.pattern.permute.xlu0 5
      %923 = vperm.xlu0 %922, %v349
      %v924 = vpop.permute.xlu0 %923
      %926 = vset.pattern.permute.xlu0 5
      %927 = vperm.xlu0 %926, %v350
      %v928 = vpop.permute.xlu0 %927
      %930 = vset.pattern.permute.xlu0 5
      %931 = vperm.xlu0 %930, %v351
      %v932 = vpop.permute.xlu0 %931
      %934 = vset.pattern.permute.xlu0 5
      %935 = vperm.xlu0 %934, %v352
      %v936 = vpop.permute.xlu0 %935
      %v938 = vmul.f32 %v305, %v876
      %v939 = vmul.f32 %v306, %v880
      %v940 = vmul.f32 %v307, %v884
      %v941 = vmul.f32 %v308, %v888
      %v942 = vmul.f32 %v309, %v892
      %v943 = vmul.f32 %v310, %v896
      %v944 = vmul.f32 %v311, %v900
      %v945 = vmul.f32 %v312, %v904
      %v946 = vmul.f32 %v313, %v908
      %v947 = vmul.f32 %v314, %v912
      %v948 = vmul.f32 %v315, %v916
      %v949 = vmul.f32 %v316, %v920
      %v950 = vmul.f32 %v317, %v924
      %v951 = vmul.f32 %v318, %v928
      %v952 = vmul.f32 %v319, %v932
      %v953 = vmul.f32 %v320, %v936
      %v954 = vmax.f32 %v938, %v942
      %v955 = vmax.f32 %v939, %v943
      %v956 = vmax.f32 %v940, %v944
      %v957 = vmax.f32 %v941, %v945
      %v958 = vmax.f32 %v954, %v946
      %v959 = vmax.f32 %v955, %v947
      %v960 = vmax.f32 %v956, %v948
      %v961 = vmax.f32 %v957, %v949
      %v962 = vmax.f32 %v958, %v950
      %v963 = vmax.f32 %v959, %v951
      %v964 = vmax.f32 %v960, %v952
      %v965 = vmax.f32 %v961, %v953
      %v966 = vmax.f32 %v962, %v963
      %v967 = vmax.f32 %v964, %v965
      %v968 = vmax.f32 %v966, %v967
      %v969 = vrot.slane %v968, 4
      %v970 = vmax.f32 %v968, %v969
      %v971 = vrot.slane %v970, 2
      %v972 = vmax.f32 %v970, %v971
      %v973 = vrot.slane %v972, 1
      %v974 = vmax.f32 %v972, %v973
      %975 = vset.pattern.permute.xlu0 6
      %976 = vperm.xlu0 %975, %v337
      %v977 = vpop.permute.xlu0 %976
      %979 = vset.pattern.permute.xlu0 6
      %980 = vperm.xlu0 %979, %v338
      %v981 = vpop.permute.xlu0 %980
      %983 = vset.pattern.permute.xlu0 6
      %984 = vperm.xlu0 %983, %v339
      %v985 = vpop.permute.xlu0 %984
      %987 = vset.pattern.permute.xlu0 6
      %988 = vperm.xlu0 %987, %v340
      %v989 = vpop.permute.xlu0 %988
      %991 = vset.pattern.permute.xlu0 6
      %992 = vperm.xlu0 %991, %v341
      %v993 = vpop.permute.xlu0 %992
      %995 = vset.pattern.permute.xlu0 6
      %996 = vperm.xlu0 %995, %v342
      %v997 = vpop.permute.xlu0 %996
      %999 = vset.pattern.permute.xlu0 6
      %1000 = vperm.xlu0 %999, %v343
      %v1001 = vpop.permute.xlu0 %1000
      %1003 = vset.pattern.permute.xlu0 6
      %1004 = vperm.xlu0 %1003, %v344
      %v1005 = vpop.permute.xlu0 %1004
      %1007 = vset.pattern.permute.xlu0 6
      %1008 = vperm.xlu0 %1007, %v345
      %v1009 = vpop.permute.xlu0 %1008
      %1011 = vset.pattern.permute.xlu0 6
      %1012 = vperm.xlu0 %1011, %v346
      %v1013 = vpop.permute.xlu0 %1012
      %1015 = vset.pattern.permute.xlu0 6
      %1016 = vperm.xlu0 %1015, %v347
      %v1017 = vpop.permute.xlu0 %1016
      %1019 = vset.pattern.permute.xlu0 6
      %1020 = vperm.xlu0 %1019, %v348
      %v1021 = vpop.permute.xlu0 %1020
      %1023 = vset.pattern.permute.xlu0 6
      %1024 = vperm.xlu0 %1023, %v349
      %v1025 = vpop.permute.xlu0 %1024
      %1027 = vset.pattern.permute.xlu0 6
      %1028 = vperm.xlu0 %1027, %v350
      %v1029 = vpop.permute.xlu0 %1028
      %1031 = vset.pattern.permute.xlu0 6
      %1032 = vperm.xlu0 %1031, %v351
      %v1033 = vpop.permute.xlu0 %1032
      %1035 = vset.pattern.permute.xlu0 6
      %1036 = vperm.xlu0 %1035, %v352
      %v1037 = vpop.permute.xlu0 %1036
      %v1039 = vmul.f32 %v305, %v977
      %v1040 = vmul.f32 %v306, %v981
      %v1041 = vmul.f32 %v307, %v985
      %v1042 = vmul.f32 %v308, %v989
      %v1043 = vmul.f32 %v309, %v993
      %v1044 = vmul.f32 %v310, %v997
      %v1045 = vmul.f32 %v311, %v1001
      %v1046 = vmul.f32 %v312, %v1005
      %v1047 = vmul.f32 %v313, %v1009
      %v1048 = vmul.f32 %v314, %v1013
      %v1049 = vmul.f32 %v315, %v1017
      %v1050 = vmul.f32 %v316, %v1021
      %v1051 = vmul.f32 %v317, %v1025
      %v1052 = vmul.f32 %v318, %v1029
      %v1053 = vmul.f32 %v319, %v1033
      %v1054 = vmul.f32 %v320, %v1037
      %v1055 = vmax.f32 %v1039, %v1043
      %v1056 = vmax.f32 %v1040, %v1044
      %v1057 = vmax.f32 %v1041, %v1045
      %v1058 = vmax.f32 %v1042, %v1046
      %v1059 = vmax.f32 %v1055, %v1047
      %v1060 = vmax.f32 %v1056, %v1048
      %v1061 = vmax.f32 %v1057, %v1049
      %v1062 = vmax.f32 %v1058, %v1050
      %v1063 = vmax.f32 %v1059, %v1051
      %v1064 = vmax.f32 %v1060, %v1052
      %v1065 = vmax.f32 %v1061, %v1053
      %v1066 = vmax.f32 %v1062, %v1054
      %v1067 = vmax.f32 %v1063, %v1064
      %v1068 = vmax.f32 %v1065, %v1066
      %v1069 = vmax.f32 %v1067, %v1068
      %v1070 = vrot.slane %v1069, 4
      %v1071 = vmax.f32 %v1069, %v1070
      %v1072 = vrot.slane %v1071, 2
      %v1073 = vmax.f32 %v1071, %v1072
      %v1074 = vrot.slane %v1073, 1
      %v1075 = vmax.f32 %v1073, %v1074
      %1076 = vset.pattern.permute.xlu0 7
      %1077 = vperm.xlu0 %1076, %v337
      %v1078 = vpop.permute.xlu0 %1077
      %1080 = vset.pattern.permute.xlu0 7
      %1081 = vperm.xlu0 %1080, %v338
      %v1082 = vpop.permute.xlu0 %1081
      %1084 = vset.pattern.permute.xlu0 7
      %1085 = vperm.xlu0 %1084, %v339
      %v1086 = vpop.permute.xlu0 %1085
      %1088 = vset.pattern.permute.xlu0 7
      %1089 = vperm.xlu0 %1088, %v340
      %v1090 = vpop.permute.xlu0 %1089
      %1092 = vset.pattern.permute.xlu0 7
      %1093 = vperm.xlu0 %1092, %v341
      %v1094 = vpop.permute.xlu0 %1093
      %1096 = vset.pattern.permute.xlu0 7
      %1097 = vperm.xlu0 %1096, %v342
      %v1098 = vpop.permute.xlu0 %1097
      %1100 = vset.pattern.permute.xlu0 7
      %1101 = vperm.xlu0 %1100, %v343
      %v1102 = vpop.permute.xlu0 %1101
      %1104 = vset.pattern.permute.xlu0 7
      %1105 = vperm.xlu0 %1104, %v344
      %v1106 = vpop.permute.xlu0 %1105
      %1108 = vset.pattern.permute.xlu0 7
      %1109 = vperm.xlu0 %1108, %v345
      %v1110 = vpop.permute.xlu0 %1109
      %1112 = vset.pattern.permute.xlu0 7
      %1113 = vperm.xlu0 %1112, %v346
      %v1114 = vpop.permute.xlu0 %1113
      %1116 = vset.pattern.permute.xlu0 7
      %1117 = vperm.xlu0 %1116, %v347
      %v1118 = vpop.permute.xlu0 %1117
      %1120 = vset.pattern.permute.xlu0 7
      %1121 = vperm.xlu0 %1120, %v348
      %v1122 = vpop.permute.xlu0 %1121
      %1124 = vset.pattern.permute.xlu0 7
      %1125 = vperm.xlu0 %1124, %v349
      %v1126 = vpop.permute.xlu0 %1125
      %1128 = vset.pattern.permute.xlu0 7
      %1129 = vperm.xlu0 %1128, %v350
      %v1130 = vpop.permute.xlu0 %1129
      %1132 = vset.pattern.permute.xlu0 7
      %1133 = vperm.xlu0 %1132, %v351
      %v1134 = vpop.permute.xlu0 %1133
      %1136 = vset.pattern.permute.xlu0 7
      %1137 = vperm.xlu0 %1136, %v352
      %v1138 = vpop.permute.xlu0 %1137
      %v1140 = vmul.f32 %v305, %v1078
      %v1141 = vmul.f32 %v306, %v1082
      %v1142 = vmul.f32 %v307, %v1086
      %v1143 = vmul.f32 %v308, %v1090
      %v1144 = vmul.f32 %v309, %v1094
      %v1145 = vmul.f32 %v310, %v1098
      %v1146 = vmul.f32 %v311, %v1102
      %v1147 = vmul.f32 %v312, %v1106
      %v1148 = vmul.f32 %v313, %v1110
      %v1149 = vmul.f32 %v314, %v1114
      %v1150 = vmul.f32 %v315, %v1118
      %v1151 = vmul.f32 %v316, %v1122
      %v1152 = vmul.f32 %v317, %v1126
      %v1153 = vmul.f32 %v318, %v1130
      %v1154 = vmul.f32 %v319, %v1134
      %v1155 = vmul.f32 %v320, %v1138
      %v1156 = vmax.f32 %v1140, %v1144
      %v1157 = vmax.f32 %v1141, %v1145
      %v1158 = vmax.f32 %v1142, %v1146
      %v1159 = vmax.f32 %v1143, %v1147
      %v1160 = vmax.f32 %v1156, %v1148
      %v1161 = vmax.f32 %v1157, %v1149
      %v1162 = vmax.f32 %v1158, %v1150
      %v1163 = vmax.f32 %v1159, %v1151
      %v1164 = vmax.f32 %v1160, %v1152
      %v1165 = vmax.f32 %v1161, %v1153
      %v1166 = vmax.f32 %v1162, %v1154
      %v1167 = vmax.f32 %v1163, %v1155
      %v1168 = vmax.f32 %v1164, %v1165
      %v1169 = vmax.f32 %v1166, %v1167
      %v1170 = vmax.f32 %v1168, %v1169
      %v1171 = vrot.slane %v1170, 4
      %v1172 = vmax.f32 %v1170, %v1171
      %v1173 = vrot.slane %v1172, 2
      %v1174 = vmax.f32 %v1172, %v1173
      %v1175 = vrot.slane %v1174, 1
      %v1176 = vmax.f32 %v1174, %v1175
      %vm1177 = vcmask 1040384
      %v1178 = vsel %vm1177, %v469, %v570
      %vm1179 = vcmask 1041408
      %v1180 = vsel %vm1179, %v1178, %v671
      %vm1181 = vcmask 1042432
      %v1182 = vsel %vm1181, %v1180, %v772
      %vm1183 = vcmask 1043456
      %v1184 = vsel %vm1183, %v1182, %v873
      %vm1185 = vcmask 1044480
      %v1186 = vsel %vm1185, %v1184, %v974
      %vm1187 = vcmask 1045504
      %v1188 = vsel %vm1187, %v1186, %v1075
      %vm1189 = vcmask 1046528
      %v1190 = vsel %vm1189, %v1188, %v1176
      %1191 = vst [vmem:[#allocation4] sm:$0xff] %v1190
    $region25: #{tpu_custom_call.1} parent=1 // pred_fallthru
      _
    // Predicated region
    $region26: #{tpu_custom_call.1} parent=1 // pred_check
      _
    $region27: #{tpu_custom_call.1} parent=1 // pred_check_branch
      %1193 = sbr.rel (0) target = $region29
    $region28: #{tpu_custom_call.1} parent=1 // pred_region
      %1195 = vsyncadd [#allocation3], 0
      %s1196 = sshll.u32 [#allocation2], 4
      %s1197 = int_to_ptr.vmem [resolvable:$true] %s1196
      %s1198 = sshll.u32 %s4, 4
      %s1199 = int_to_ptr.hbm [resolvable:$true] %s1198
      %1204 = dma.vmem_to_hbm [thread:$0]  %s1197, 2048, %s1199, [#allocation3], 128, 128, 8
    $region29: #{tpu_custom_call.1} parent=1 // pred_fallthru
      _
    // Predicated region
    $region30: #{tpu_custom_call.1} parent=1 // pred_check
      _
    $region31: #{tpu_custom_call.1} parent=1 // pred_check_branch
      %1206 = sbr.rel (0) target = $region33
    $region32: #{tpu_custom_call.1} parent=1 // pred_region
      %1208 = vsyncadd [#allocation5], 0
      %s1210 = sshll.u32 [#allocation4], 4
      %s1211 = int_to_ptr.vmem [resolvable:$true] %s1210
      %s1212 = sshll.u32 %s5, 4
      %s1213 = int_to_ptr.hbm [resolvable:$true] %s1212
      %1215 = dma.vmem_to_hbm [thread:$0]  %s1211, 128, %s1213, [#allocation5]
    $region33: #{tpu_custom_call.1} parent=1 // pred_fallthru
      _
    // Predicated region
    $region34: #{tpu_custom_call.1} parent=1 // pred_check
      _
    $region35: #{tpu_custom_call.1} parent=1 // pred_check_branch
      %1217 = sbr.rel (0) target = $region37
    $region36: #{tpu_custom_call.1} parent=1 // pred_region
      %1219 = dma.done [#allocation3], 2048
    $region37: #{tpu_custom_call.1} parent=1 // pred_fallthru
      _
    // Predicated region
    $region38: #{tpu_custom_call.1} parent=1 // pred_check
      _
    $region39: #{tpu_custom_call.1} parent=1 // pred_check_branch
      %1221 = sbr.rel (0) target = $region41
    $region40: #{tpu_custom_call.1} parent=1 // pred_region
      %1223 = dma.done [#allocation5], 128
    $region41: #{tpu_custom_call.1} parent=1 // pred_fallthru
      _
    %1224 = vsyncpa [#allocation3], 1
    %1225 = vsyncpa [#allocation5], 1

</llo_original>
